<compile_context>
chip_gen: v7x
topology: tpu7x:2x2x1
jax: 0.10.0
libtpu: 0.0.40
codegen_flags: <defaults>
</compile_context>

<pallas_src>
import math

import jax
import jax.numpy as jnp
from jax.experimental import pallas as pl
from jax.experimental.pallas import tpu as pltpu


_LANES = 128          # lane width of a vreg; last block dim is exactly lane-dense
_TM_MAX = 2048        # 2048 rows * 128 lanes * 4 B * 3 ch = 3 MiB/block (f32);
                      # ~12 MiB total double-buffered in+out -> safe on v7x 64 MiB VMEM


def _rgb_to_hsv_kernel(x_ref, o_ref):
    # x_ref / o_ref blocks: (1, 3, TM, 128) in the caller's (float) dtype.
    # All internal math in float32 (also keeps partial-block garbage from faulting).
    r = x_ref[0, 0, :, :].astype(jnp.float32)
    g = x_ref[0, 1, :, :].astype(jnp.float32)
    b = x_ref[0, 2, :, :].astype(jnp.float32)

    maxc = jnp.maximum(jnp.maximum(r, g), b)
    minc = jnp.minimum(jnp.minimum(r, g), b)

    v = maxc
    deltac = maxc - minc

    # Exact (non-approx) reciprocals: EUP slot (off the VALU critical path), and
    # precise enough to match the divide-based reference to ~1 ulp.
    inv_v = pl.reciprocal(v + 1e-31, approx=False)
    s = deltac * inv_v

    # deltac == 0 -> use 1.0 to avoid div-by-zero (matches torch.where in reference)
    deltac_safe = jnp.where(deltac == 0.0, 1.0, deltac)
    inv_d = pl.reciprocal(deltac_safe, approx=False)

    # maxc_tmp = maxc - image  (per channel)
    rc = maxc - r
    gc = maxc - g
    bc = maxc - b

    # argmax over channel dim with first-occurrence tie-breaking (torch.max semantics)
    is_r_max = r == maxc
    is_g_max = jnp.logical_and(jnp.logical_not(is_r_max), g == maxc)
    # else: b is max

    h0 = bc - gc                       # max channel is R
    h1 = 2.0 * deltac + rc - bc        # max channel is G
    h2 = 4.0 * deltac + gc - rc        # max channel is B
    h = jnp.where(is_r_max, h0, jnp.where(is_g_max, h1, h2))

    h = h * inv_d
    t = h * (1.0 / 6.0)
    h = t - jnp.floor(t)               # == jnp.mod(t, 1.0), fewer VALU ops
    h = (2.0 * math.pi) * h

    out_dtype = o_ref.dtype
    o_ref[0, 0, :, :] = h.astype(out_dtype)
    o_ref[0, 1, :, :] = s.astype(out_dtype)
    o_ref[0, 2, :, :] = v.astype(out_dtype)


def _round_up(x: int, m: int) -> int:
    return -(-x // m) * m


def rgb_to_hsv(image: jax.Array) -> jax.Array:
    """Pallas TPU implementation of kornia.color.rgb_to_hsv.

    image: (*, 3, H, W) float in [0, 1]  ->  (*, 3, H, W) float HSV.
    """
    if image.ndim < 3 or image.shape[-3] != 3:
        raise ValueError(
            f"Input size must have a shape of (*, 3, H, W). Got {image.shape}"
        )

    orig_shape = image.shape
    orig_dtype = image.dtype
    H, W = image.shape[-2], image.shape[-1]
    lead = image.shape[:-3]
    B = 1
    for d in lead:
        B *= d
    N = H * W

    # Keep 16/32-bit float I/O native (halves HBM traffic for bf16/f16);
    # anything else goes through f32.
    if orig_dtype in (jnp.dtype(jnp.float32), jnp.dtype(jnp.bfloat16),
                      jnp.dtype(jnp.float16)):
        io_dtype = jnp.dtype(orig_dtype)
    else:
        io_dtype = jnp.dtype(jnp.float32)
    itemsize = io_dtype.itemsize
    sub_mult = 8 * max(1, 4 // itemsize)   # sublane packing: 8 (f32) / 16 (bf16, f16)

    # Flatten to (B, 3, N): contiguous, free reshape.
    x = image.reshape(B, 3, N)
    if x.dtype != io_dtype:
        x = x.astype(io_dtype)

    # Lane-dense layout: pixels viewed as (M, 128) rows x lanes. Pad ONLY when N is
    # not a multiple of 128 (reshape requirement); aligned shapes avoid any extra
    # HBM pass. Zero padding -> r=g=b=0 -> h=s=v=0 in the tail (no NaNs).
    M = -(-N // _LANES)                    # ceil(N / 128)
    N_pad = M * _LANES
    if N_pad != N:
        x = jnp.pad(x, ((0, 0), (0, 0), (0, N_pad - N)))
    x = x.reshape(B, 3, M, _LANES)

    # Tile the row dim. The last block may be partial: OOB reads are unused garbage
    # (math stays in f32, never stored), OOB stores are dropped by Pallas.
    target_steps = 8                       # keep both v7x TCs fed + amortize step cost
    steps_per_batch = max(1, -(-target_steps // B))
    TM = _round_up(-(-M // steps_per_batch), sub_mult)
    TM = min(TM, _round_up(M, sub_mult), _TM_MAX)
    grid = (B, pl.cdiv(M, TM))

    block = (1, 3, TM, _LANES)
    spec = pl.BlockSpec(block, lambda bi, mi: (bi, 0, mi, 0))

    out = pl.pallas_call(
        _rgb_to_hsv_kernel,
        out_shape=jax.ShapeDtypeStruct((B, 3, M, _LANES), io_dtype),
        grid_spec=pltpu.PrefetchScalarGridSpec(
            num_scalar_prefetch=0,
            grid=grid,
            in_specs=[spec],
            out_specs=spec,
        ),
        compiler_params=pltpu.CompilerParams(
            dimension_semantics=("parallel", "parallel"),
            vmem_limit_bytes=32 * 1024 * 1024,
        ),
        cost_estimate=pl.CostEstimate(
            flops=25 * B * M * _LANES,
            transcendentals=2 * B * M * _LANES,
            bytes_accessed=2 * B * 3 * M * _LANES * itemsize,
        ),
    )(x)

    out = out.reshape(B, 3, N_pad)
    if N_pad != N:
        out = out[:, :, :N]
    out = out.reshape(orig_shape)
    if out.dtype != orig_dtype:
        out = out.astype(orig_dtype)
    return out


class RgbToHsv:
    """Stateless module mirroring kornia.color.RgbToHsv."""

    def __call__(self, image: jax.Array) -> jax.Array:
        return rgb_to_hsv(image)


def _rgb_to_hsv_ref(image: jax.Array) -> jax.Array:
    """Pure-JAX reference (mirrors the PyTorch code) for a sanity check."""
    maxc = jnp.max(image, axis=-3)
    max_indices = jnp.argmax(image, axis=-3)
    minc = jnp.min(image, axis=-3)
    v = maxc
    deltac = maxc - minc
    s = deltac / (v + 1e-31)
    deltac_safe = jnp.where(deltac == 0, jnp.ones_like(deltac), deltac)
    maxc_tmp = maxc[..., None, :, :] - image
    rc = maxc_tmp[..., 0, :, :]
    gc = maxc_tmp[..., 1, :, :]
    bc = maxc_tmp[..., 2, :, :]
    h_all = jnp.stack(
        [bc - gc, 2.0 * deltac + rc - bc, 4.0 * deltac + gc - rc], axis=-3
    )
    h = jnp.take_along_axis(h_all, max_indices[..., None, :, :], axis=-3)[..., 0, :, :]
    h = h / deltac_safe
    h = jnp.mod(h / 6.0, 1.0)
    h = 2.0 * math.pi * h
    return jnp.stack([h, s, v], axis=-3)


if __name__ == "__main__":
    hsv_module = RgbToHsv()

    # Case 1: standard NCHW batch, f32, H*W % 128 == 0 (no-padding fast path).
    B, C, H, W = 2, 3, 16, 16
    x = jax.random.uniform(jax.random.PRNGKey(0), (B, C, H, W), dtype=jnp.float32)
    out = jax.block_until_ready(hsv_module(x))
    ref = _rgb_to_hsv_ref(x)
    assert out.shape == (B, 3, H, W)
    assert out.dtype == x.dtype
    assert jnp.allclose(out, ref, atol=1e-5, rtol=1e-5)

    # Case 2: no batch dim + odd spatial size (exercises pad-to-128 + partial block).
    x2 = jax.random.uniform(jax.random.PRNGKey(1), (3, 7, 9), dtype=jnp.float32)
    out2 = jax.block_until_ready(hsv_module(x2))
    ref2 = _rgb_to_hsv_ref(x2)
    assert out2.shape == (3, 7, 9)
    assert jnp.allclose(out2, ref2, atol=1e-5, rtol=1e-5)

    # Case 3: native bf16 I/O path (f32 internal math, bf16 HBM traffic).
    x3 = jax.random.uniform(jax.random.PRNGKey(2), (B, C, H, W)).astype(jnp.bfloat16)
    out3 = jax.block_until_ready(hsv_module(x3))
    ref3 = _rgb_to_hsv_ref(x3.astype(jnp.float32))
    assert out3.shape == (B, 3, H, W)
    assert out3.dtype == jnp.bfloat16
    assert jnp.allclose(out3.astype(jnp.float32), ref3, atol=5e-2, rtol=2e-2)

    print("KERNEL_OK")
</pallas_src>

<mosaic_0001>
module attributes {stable_mosaic.version = 11 : i64} {
  func.func @_rgb_to_hsv_kernel(%arg0: i32, %arg1: i32, %arg2: memref<1x3x8x128xf32, #tpu.memory_space<vmem>>, %arg3: memref<1x3x8x128xf32, #tpu.memory_space<vmem>>) attributes {dimension_semantics = [#tpu.dimension_semantics<parallel>, #tpu.dimension_semantics<parallel>], iteration_bounds = array<i64: 2, 1>, scalar_prefetch = 0 : i64, scratch_operands = 0 : i64, tpu.core_type = #tpu.core_type<tc>, window_params = [{transform_indices = @transform_0, window_bounds = array<i64: 1, 3, 8, 128>}, {transform_indices = @transform_1, window_bounds = array<i64: 1, 3, 8, 128>}]} {
    %c0 = arith.constant 0 : index
    %c0_0 = arith.constant 0 : index
    %c0_1 = arith.constant 0 : index
    %c0_2 = arith.constant 0 : index
    %0 = vector.load %arg2[%c0, %c0_0, %c0_1, %c0_2] : memref<1x3x8x128xf32, #tpu.memory_space<vmem>>, vector<1x1x8x128xf32>
    %1 = vector.shape_cast %0 : vector<1x1x8x128xf32> to vector<8x128xf32>
    %c0_3 = arith.constant 0 : index
    %c1 = arith.constant 1 : index
    %c0_4 = arith.constant 0 : index
    %c0_5 = arith.constant 0 : index
    %2 = vector.load %arg2[%c0_3, %c1, %c0_4, %c0_5] : memref<1x3x8x128xf32, #tpu.memory_space<vmem>>, vector<1x1x8x128xf32>
    %3 = vector.shape_cast %2 : vector<1x1x8x128xf32> to vector<8x128xf32>
    %c0_6 = arith.constant 0 : index
    %c2 = arith.constant 2 : index
    %c0_7 = arith.constant 0 : index
    %c0_8 = arith.constant 0 : index
    %4 = vector.load %arg2[%c0_6, %c2, %c0_7, %c0_8] : memref<1x3x8x128xf32, #tpu.memory_space<vmem>>, vector<1x1x8x128xf32>
    %5 = vector.shape_cast %4 : vector<1x1x8x128xf32> to vector<8x128xf32>
    %6 = arith.maximumf %1, %3 : vector<8x128xf32>
    %7 = arith.maximumf %6, %5 : vector<8x128xf32>
    %8 = arith.minimumf %1, %3 : vector<8x128xf32>
    %9 = arith.minimumf %8, %5 : vector<8x128xf32>
    %10 = arith.subf %7, %9 : vector<8x128xf32>
    %cst = arith.constant 9.99999979E-32 : f32
    %11 = vector.broadcast %cst : f32 to vector<8x128xf32>
    %12 = arith.addf %7, %11 : vector<8x128xf32>
    %13 = tpu.reciprocal %12 : vector<8x128xf32> -> vector<8x128xf32>
    %14 = arith.mulf %10, %13 : vector<8x128xf32>
    %cst_9 = arith.constant 0.000000e+00 : f32
    %15 = vector.broadcast %cst_9 : f32 to vector<8x128xf32>
    %16 = arith.cmpf oeq, %10, %15 : vector<8x128xf32>
    %cst_10 = arith.constant 1.000000e+00 : f32
    %17 = vector.broadcast %cst_10 : f32 to vector<8x128xf32>
    %18 = arith.select %16, %17, %10 : vector<8x128xi1>, vector<8x128xf32>
    %19 = tpu.reciprocal %18 : vector<8x128xf32> -> vector<8x128xf32>
    %20 = arith.subf %7, %1 : vector<8x128xf32>
    %21 = arith.subf %7, %3 : vector<8x128xf32>
    %22 = arith.subf %7, %5 : vector<8x128xf32>
    %23 = arith.cmpf oeq, %1, %7 : vector<8x128xf32>
    %cst_11 = arith.constant dense<true> : vector<8x128xi1>
    %24 = arith.xori %23, %cst_11 : vector<8x128xi1>
    %25 = arith.cmpf oeq, %3, %7 : vector<8x128xf32>
    %26 = arith.andi %24, %25 : vector<8x128xi1>
    %27 = arith.subf %22, %21 : vector<8x128xf32>
    %cst_12 = arith.constant 2.000000e+00 : f32
    %28 = vector.broadcast %cst_12 : f32 to vector<8x128xf32>
    %29 = arith.mulf %28, %10 : vector<8x128xf32>
    %30 = arith.addf %29, %20 : vector<8x128xf32>
    %31 = arith.subf %30, %22 : vector<8x128xf32>
    %cst_13 = arith.constant 4.000000e+00 : f32
    %32 = vector.broadcast %cst_13 : f32 to vector<8x128xf32>
    %33 = arith.mulf %32, %10 : vector<8x128xf32>
    %34 = arith.addf %33, %21 : vector<8x128xf32>
    %35 = arith.subf %34, %20 : vector<8x128xf32>
    %36 = arith.select %26, %31, %35 : vector<8x128xi1>, vector<8x128xf32>
    %37 = arith.select %23, %27, %36 : vector<8x128xi1>, vector<8x128xf32>
    %38 = arith.mulf %37, %19 : vector<8x128xf32>
    %cst_14 = arith.constant 0.166666672 : f32
    %39 = vector.broadcast %cst_14 : f32 to vector<8x128xf32>
    %40 = arith.mulf %38, %39 : vector<8x128xf32>
    %41 = math.floor %40 : vector<8x128xf32>
    %42 = arith.subf %40, %41 : vector<8x128xf32>
    %cst_15 = arith.constant 6.28318548 : f32
    %43 = vector.broadcast %cst_15 : f32 to vector<8x128xf32>
    %44 = arith.mulf %43, %42 : vector<8x128xf32>
    %c0_16 = arith.constant 0 : index
    %c0_17 = arith.constant 0 : index
    %c0_18 = arith.constant 0 : index
    %c0_19 = arith.constant 0 : index
    %45 = vector.load %arg3[%c0_16, %c0_17, %c0_18, %c0_19] : memref<1x3x8x128xf32, #tpu.memory_space<vmem>>, vector<1x1x8x128xf32>
    %46 = vector.shape_cast %45 : vector<1x1x8x128xf32> to vector<8x128xf32>
    %47 = vector.shape_cast %44 : vector<8x128xf32> to vector<1x1x8x128xf32>
    tpu.vector_store %arg3[%c0_16, %c0_17, %c0_18, %c0_19], %47 {strides = array<i32>} : memref<1x3x8x128xf32, #tpu.memory_space<vmem>>, vector<1x1x8x128xf32>,
    %c0_20 = arith.constant 0 : index
    %c1_21 = arith.constant 1 : index
    %c0_22 = arith.constant 0 : index
    %c0_23 = arith.constant 0 : index
    %48 = vector.load %arg3[%c0_20, %c1_21, %c0_22, %c0_23] : memref<1x3x8x128xf32, #tpu.memory_space<vmem>>, vector<1x1x8x128xf32>
    %49 = vector.shape_cast %48 : vector<1x1x8x128xf32> to vector<8x128xf32>
    %50 = vector.shape_cast %14 : vector<8x128xf32> to vector<1x1x8x128xf32>
    tpu.vector_store %arg3[%c0_20, %c1_21, %c0_22, %c0_23], %50 {strides = array<i32>} : memref<1x3x8x128xf32, #tpu.memory_space<vmem>>, vector<1x1x8x128xf32>,
    %c0_24 = arith.constant 0 : index
    %c2_25 = arith.constant 2 : index
    %c0_26 = arith.constant 0 : index
    %c0_27 = arith.constant 0 : index
    %51 = vector.load %arg3[%c0_24, %c2_25, %c0_26, %c0_27] : memref<1x3x8x128xf32, #tpu.memory_space<vmem>>, vector<1x1x8x128xf32>
    %52 = vector.shape_cast %51 : vector<1x1x8x128xf32> to vector<8x128xf32>
    %53 = vector.shape_cast %7 : vector<8x128xf32> to vector<1x1x8x128xf32>
    tpu.vector_store %arg3[%c0_24, %c2_25, %c0_26, %c0_27], %53 {strides = array<i32>} : memref<1x3x8x128xf32, #tpu.memory_space<vmem>>, vector<1x1x8x128xf32>,
    return
  }
  func.func @transform_0(%arg0: i32, %arg1: i32) -> (i32, i32, i32, i32) {
    %c0_i32 = arith.constant 0 : i32
    %c0_i32_0 = arith.constant 0 : i32
    %c0_i32_1 = arith.constant 0 : i32
    return %arg0, %c0_i32, %arg1, %c0_i32_0 : i32, i32, i32, i32
  }
  func.func @transform_1(%arg0: i32, %arg1: i32) -> (i32, i32, i32, i32) {
    %c0_i32 = arith.constant 0 : i32
    %c0_i32_0 = arith.constant 0 : i32
    %c0_i32_1 = arith.constant 0 : i32
    return %arg0, %c0_i32, %arg1, %c0_i32_0 : i32, i32, i32, i32
  }
}

</mosaic_0001>

<llo_original>
// kernel: tpu_custom_call.1
$region0: #{tpu_custom_call.1}
  #allocation0 [shape = 'u32[]', space=smem, size = 0x4, offset = 0x4, fixed_abs, tag = 'smem constant byte address 0x4 - core index']
  #allocation1 [shape = 'u32[144,128]{1,0:T(1,128)}', space=vmem, size = 0x12000, scoped, tag = 'internal scratch']
  #allocation6 [shape = 's32[]', space=sflag, size = 0x4, offset = 0, fixed_abs, tag = 'sflag constant byte address 0x0 - dummy sync flag']
  #allocation8 [shape = 's32[]', space=sflag, size = 0x4, offset = 0, fixed_abs, tag = 'sflag constant byte address 0x0 - dummy sync flag']
  %s0 = inlined_call_operand.hbm [shape: f32[2,3,2,128], index: 0, kind: input, shape index: {}]
  %s1 = inlined_call_operand.hbm [shape: f32[2,3,2,128], index: 1, kind: output, shape index: {}]
  %s2 = sld [smem:[#allocation0]]
  $region41: #{tpu_custom_call.1} parent=0
    _
  %s4 = ssub.s32 1, %s2
  %s5 = scalar_select 0, %s4, %s2
  $region1: #{tpu_custom_call.1} parent=0
    #allocation2 [shape = 'u8[24576]{0}', space=vmem, size = 0x6000, scoped, tag = 'input window, operand 0']
    #allocation3 [shape = 's32[2]{0}', space=sflag, size = 0x8, scoped, tag = 'scoped memory for tpu_custom_call.1']
    #allocation4 [shape = 's32[2]{0}', space=sflag, size = 0x8, scoped, tag = 'scoped memory for tpu_custom_call.1']
    #allocation5 [shape = 'u8[24576]{0}', space=vmem, size = 0x6000, scoped, tag = 'output window, operand 0']
    %6 = vsyncpa [#allocation3], 0
    %s7 = scalar_lea.sflag [#allocation3], 1
    %8 = vsyncpa %s7, 0
    %9 = vsyncpa [#allocation4], 0
    %s10 = scalar_lea.sflag [#allocation4], 1
    %11 = vsyncpa %s10, 0
    loop: start=0, step=1, limit=4
    $region2: #{tpu_custom_call.1} parent=1 // loop_pre_header
      _
    $region3: #{tpu_custom_call.1} parent=1 // loop_header
      %s13 = sphi 0, %s17
      %p14 = scmp.ge.s32.totalorder %s13, 4
      %s20 = sphi 0, %s32
      %s21 = sphi 0, %s28
      %s22 = sphi 0, %s20
      %s23 = sphi 0, %s21
      %s24 = sphi 0, %s22
      %s25 = sphi 0, %s23
      %s37 = sphi 0, %s39
      %s40 = sphi 0, %s37
      %s41 = sphi 0, %s40
      %s57 = sphi 0, %s41
      %s65 = sphi 0, %s67
      %s68 = sphi 0, %s65
      %s69 = sphi 0, %s68
      %s85 = sphi 0, %s69
    $region4: #{tpu_custom_call.1} parent=1 // loop_header_branch
      %16 = sbr.rel (%p14) target = $region8
    $region5: #{tpu_custom_call.1} parent=1 // loop_body
      %s18 = ssub.s32 %s13, 1
      %s19 = ssub.s32 %s13, 2
      %s26 = sadd.s32 1, %s21
      %p27 = scmp.ge.s32.totalorder %s26, 1
      %s28 = scalar_select %p27, 0, %s26
      %s29 = sadd.s32 1, %s20
      %s30 = scalar_select %p27, %s29, %s20
      %p31 = scmp.ge.s32.totalorder %s30, 2
      %s32 = scalar_select %p31, 0, %s30
      %s33 = ssub.s32 %s20, %s32
      %s34 = ssub.s32 %s21, %s28
      %s35 = sor.u32 %s33, %s34
      %p36 = scmp.eq.s32.totalorder %s35, 0
      %s38 = sadd.s32 %s37, 1
      %s39 = scalar_select %p36, %s37, %s38
      %p42 = pneg %p36
      %p43 = scmp.eq.s32.totalorder %s13, 1
      %p44 = por %p42, %p43
      %p45 = scmp.ne.s32.totalorder %s37, %s40
      %p46 = scmp.eq.s32.totalorder %s13, 0
      %p47 = por %p45, %p46
      %p48 = scmp.ne.s32.totalorder %s37, %s40
      %p49 = scmp.eq.s32.totalorder %s18, 1
      %p50 = por %p48, %p49
      %p51 = scmp.ne.s32.totalorder %s40, %s41
      %p52 = scmp.eq.s32.totalorder %s18, 0
      %p53 = por %p51, %p52
      %p54 = scmp.ne.s32.totalorder %s40, %s41
      %p55 = scmp.eq.s32.totalorder %s19, 1
      %p56 = por %p54, %p55
      %p58 = scmp.ne.s32.totalorder %s41, %s57
      %p59 = scmp.eq.s32.totalorder %s19, 0
      %p60 = por %p58, %p59
      %s61 = ssub.s32 %s20, %s32
      %s62 = ssub.s32 %s21, %s28
      %s63 = sor.u32 %s61, %s62
      %p64 = scmp.eq.s32.totalorder %s63, 0
      %s66 = sadd.s32 %s65, 1
      %s67 = scalar_select %p64, %s65, %s66
      %p70 = pneg %p64
      %p71 = scmp.eq.s32.totalorder %s13, 1
      %p72 = por %p70, %p71
      %p73 = scmp.ne.s32.totalorder %s65, %s68
      %p74 = scmp.eq.s32.totalorder %s13, 0
      %p75 = por %p73, %p74
      %p76 = scmp.ne.s32.totalorder %s65, %s68
      %p77 = scmp.eq.s32.totalorder %s18, 1
      %p78 = por %p76, %p77
      %p79 = scmp.ne.s32.totalorder %s68, %s69
      %p80 = scmp.eq.s32.totalorder %s18, 0
      %p81 = por %p79, %p80
      %p82 = scmp.ne.s32.totalorder %s68, %s69
      %p83 = scmp.eq.s32.totalorder %s19, 1
      %p84 = por %p82, %p83
      %p86 = scmp.ne.s32.totalorder %s69, %s85
      %p87 = scmp.eq.s32.totalorder %s19, 0
      %p88 = por %p86, %p87
      %p89 = scmp.le.s32.totalorder 1, %s13
      %p90 = scmp.lt.s32.totalorder %s13, 3
      %p91 = pnand %p89, %p90
      %p92 = pneg %p91
      // Predicated region
      $region9: #{tpu_custom_call.1} parent=5 // pred_check
        _
      $region10: #{tpu_custom_call.1} parent=5 // pred_check_branch
        %94 = sbr.rel (%p91) target = $region12
      $region11: #{tpu_custom_call.1} parent=5 // pred_region
        %s95 = ssub.s32 %s13, 1
      $region12: #{tpu_custom_call.1} parent=5 // pred_fallthru
        _
      %p96 = scmp.lt.s32.totalorder %s13, 2
      // Predicated region
      $region13: #{tpu_custom_call.1} parent=5 // pred_check
        %p97 = pneg %p96
      $region14: #{tpu_custom_call.1} parent=5 // pred_check_branch
        %99 = sbr.rel (%p97) target = $region16
      $region15: #{tpu_custom_call.1} parent=5 // pred_region
        // Predicated region
        $region17: #{tpu_custom_call.1} parent=15 // pred_check
          %p100 = pneg %p47
        $region18: #{tpu_custom_call.1} parent=15 // pred_check_branch
          %102 = sbr.rel (%p100) target = $region20
        $region19: #{tpu_custom_call.1} parent=15 // pred_region
          #allocation7 [shape = 'u32[6]{0}', space=smem, size = 0x18, scoped, tag = 'DMA stride descriptor']
          %s103 = sand.u32 %s37, 1
          %s104 = scalar_lea.sflag [#allocation3], %s103
          %s105 = sand.u32 %s37, 1
          %s106 = smul.addr %s105, 24
          %s107 = scalar_lea.vmem [#allocation2], %s106
          %s108 = smul.u32 4, %s21
          %s109 = ssub.s32 1, %s108
          %s110 = smul.u32 96, %s109
          %s112 = ssub.s32 384, %s110
          %113 = vsyncadd %s104, %s112
          %p114 = scmp.ne.s32.totalorder 0, %s110
          %s115 = smul.addr %s20, 3
          %s116 = sadd.s32 %s108, %s115
          %s117 = smul.addr %s116, 32
          %s118 = scalar_lea.hbm %s0, %s117
          %s119 = smul.u32 2, %s109
          %s120 = smul.u32 %s119, 3
          %s122 = sshll.u32 1, 14
          %s123 = sxor.u32 4294967295, %s122
          %s125 = sld [smem:[#allocation0]]
          %s126 = sadd.s32 2, %s125
          %s128 = sshll.u32 7, 26
          %s129 = sxor.u32 4294967295, %s128
          %s130 = sand.u32 0, %s129
          %s131 = sshll.u32 %s126, 26
          %s132 = sor.u32 %s130, %s131
          %s133 = sshll.u32 %s107, 4
          %s134 = int_to_ptr.vmem [resolvable:$true] %s133
          %s135 = sshll.u32 %s120, 4
          %140 = sst [smem:[#allocation7]] 32
          %s141 = scalar_lea.smem [#allocation7], 1
          %142 = sst [smem:[%s141]] 128
          %s143 = scalar_lea.smem [#allocation7], 2
          %144 = sst [smem:[%s143]] %s109
          %s145 = scalar_lea.smem [#allocation7], 3
          %146 = sst [smem:[%s145]] 32
          %s147 = scalar_lea.smem [#allocation7], 4
          %148 = sst [smem:[%s147]] 32
          %s149 = scalar_lea.smem [#allocation7], 5
          %150 = sst [smem:[%s149]] 2
          %152 = dma.general (%p114), %s118, %s135, %s134, %s104, [#allocation6], [#allocation7], %s132, 0
        $region20: #{tpu_custom_call.1} parent=15 // pred_fallthru
          _
      $region16: #{tpu_custom_call.1} parent=5 // pred_fallthru
        _
      %p153 = scmp.le.s32.totalorder 1, %s13
      %p154 = scmp.lt.s32.totalorder %s13, 3
      %p155 = pnand %p153, %p154
      %p156 = pneg %p155
      // Predicated region
      $region21: #{tpu_custom_call.1} parent=5 // pred_check
        _
      $region22: #{tpu_custom_call.1} parent=5 // pred_check_branch
        %158 = sbr.rel (%p155) target = $region24
      $region23: #{tpu_custom_call.1} parent=5 // pred_region
        %s159 = ssub.s32 %s13, 1
        %s160 = sand.u32 %s40, 1
        %s161 = scalar_lea.sflag [#allocation3], %s160
        %s162 = sand.u32 %s40, 1
        %s163 = smul.addr %s162, 24
        %s164 = scalar_lea.vmem [#allocation2], %s163
        // Predicated region
        $region25: #{tpu_custom_call.1} parent=23 // pred_check
          %p165 = pneg %p53
        $region26: #{tpu_custom_call.1} parent=23 // pred_check_branch
          %167 = sbr.rel (%p165) target = $region28
        $region27: #{tpu_custom_call.1} parent=23 // pred_region
          %168 = dma.done %s161, 384
        $region28: #{tpu_custom_call.1} parent=23 // pred_fallthru
          _
        %s169 = sand.u32 %s40, 1
        %s170 = scalar_lea.sflag [#allocation3], %s169
        %s171 = sand.u32 %s40, 1
        %s172 = smul.addr %s171, 24
        %s173 = scalar_lea.vmem [#allocation2], %s172
        %p174 = pneg %p53
        %p175 = pneg %p50
        %p176 = pneg %p81
        %p177 = pneg %p78
        %s178 = sand.u32 %s68, 1
        %s179 = scalar_lea.sflag [#allocation4], %s178
        %s180 = sand.u32 %s68, 1
        %s181 = smul.addr %s180, 24
        %s182 = scalar_lea.vmem [#allocation5], %s181
        %s183 = smul.u32 4, %s23
        %s184 = ssub.s32 1, %s183
        %s185 = smul.u32 96, %s184
        %s186 = smul.u32 4, %s23
        %s187 = ssub.s32 1, %s186
        %s188 = smul.u32 96, %s187
        %v189 = vld [vmem:[%s164] sm:$0xff]
        %s190 = scalar_lea.vmem %s164, 8 [#allocation2]
        %v191 = vld [vmem:[%s190] sm:$0xff]
        %s192 = scalar_lea.vmem %s164, 16 [#allocation2]
        %v193 = vld [vmem:[%s192] sm:$0xff]
        %v194 = vmax.f32 %v189, %v191
        %v195 = vmax.f32 %v194, %v193
        %v196 = vmin.f32 %v189, %v191
        %v197 = vmin.f32 %v196, %v193
        %v198 = vsub.f32 %v195, %v197
        %v199 = vadd.f32 %v195, 1e-31
        %v200 = vrcp.pop %v199
        %v201 = vmul.f32 %v198, %v200
        %vm202 = vcmp.eq.f32.partialorder %v198, 0.0
        %v203 = vsel %vm202, 1.0, %v198
        %v204 = vrcp.pop %v203
        %v205 = vsub.f32 %v195, %v189
        %v206 = vsub.f32 %v195, %v191
        %v207 = vsub.f32 %v195, %v193
        %vm208 = vcmp.eq.f32.partialorder %v189, %v195
        %vm209 = vmxor %vm208, 1
        %vm210 = vcmp.eq.f32.partialorder %v191, %v195
        %vm211 = vmand %vm209, %vm210
        %v212 = vsub.f32 %v207, %v206
        %v213 = vmul.f32 %v198, 2.0
        %v214 = vadd.f32 %v213, %v205
        %v215 = vsub.f32 %v214, %v207
        %v216 = vmul.f32 %v198, 4.0
        %v217 = vadd.f32 %v216, %v206
        %v218 = vsub.f32 %v217, %v205
        %v219 = vsel %vm211, %v215, %v218
        %v220 = vsel %vm208, %v212, %v219
        %v221 = vmul.f32 %v220, %v204
        %v222 = vmul.f32 %v221, 0.16666667
        %v223 = vfloor.f32 %v222
        %v224 = vsub.f32 %v222, %v223
        %v225 = vmul.f32 %v224, 6.2831855
        %226 = vst [vmem:[%s182] sm:$0xff] %v225
        %s227 = scalar_lea.vmem %s182, 8 [#allocation5]
        %228 = vst [vmem:[%s227] sm:$0xff] %v201
        %s229 = scalar_lea.vmem %s182, 16 [#allocation5]
        %230 = vst [vmem:[%s229] sm:$0xff] %v195
        %s231 = sand.u32 %s68, 1
        %s232 = scalar_lea.sflag [#allocation4], %s231
        %s233 = sand.u32 %s68, 1
        %s234 = smul.addr %s233, 24
        %s235 = scalar_lea.vmem [#allocation5], %s234
        // Predicated region
        $region29: #{tpu_custom_call.1} parent=23 // pred_check
          %p236 = pneg %p78
        $region30: #{tpu_custom_call.1} parent=23 // pred_check_branch
          %238 = sbr.rel (%p236) target = $region32
        $region31: #{tpu_custom_call.1} parent=23 // pred_region
          #allocation9 [shape = 'u32[6]{0}', space=smem, size = 0x18, scoped, tag = 'DMA stride descriptor']
          %s239 = smul.u32 4, %s23
          %s240 = ssub.s32 1, %s239
          %s241 = smul.u32 96, %s240
          %s243 = ssub.s32 384, %s241
          %244 = vsyncadd %s232, %s243
          %p245 = scmp.ne.s32.totalorder 0, %s241
          %s246 = smul.addr %s22, 3
          %s247 = sadd.s32 %s239, %s246
          %s248 = smul.addr %s247, 32
          %s249 = scalar_lea.hbm %s1, %s248
          %s250 = smul.u32 2, %s240
          %s251 = smul.u32 %s250, 3
          %s253 = sshll.u32 1, 14
          %s254 = sxor.u32 4294967295, %s253
          %s257 = sshll.u32 7, 18
          %s258 = sxor.u32 4294967295, %s257
          %s259 = sand.u32 0, %s258
          %s261 = sor.u32 %s259, 0
          %s263 = sshll.u32 3, 24
          %s264 = sxor.u32 4294967295, %s263
          %s265 = sand.u32 %s261, %s264
          %s267 = sor.u32 %s265, 0
          %s268 = sshll.u32 %s235, 4
          %s269 = int_to_ptr.vmem [resolvable:$true] %s268
          %s270 = sshll.u32 %s251, 4
          %275 = sst [smem:[#allocation9]] 128
          %s276 = scalar_lea.smem [#allocation9], 1
          %277 = sst [smem:[%s276]] 32
          %s278 = scalar_lea.smem [#allocation9], 2
          %279 = sst [smem:[%s278]] %s240
          %s280 = scalar_lea.smem [#allocation9], 3
          %281 = sst [smem:[%s280]] 32
          %s282 = scalar_lea.smem [#allocation9], 4
          %283 = sst [smem:[%s282]] 32
          %s284 = scalar_lea.smem [#allocation9], 5
          %285 = sst [smem:[%s284]] 2
          %287 = dma.general (%p245), %s269, %s270, %s249, %s232, [#allocation8], [#allocation9], %s267, 0
        $region32: #{tpu_custom_call.1} parent=23 // pred_fallthru
          _
      $region24: #{tpu_custom_call.1} parent=5 // pred_fallthru
        _
      %p288 = scmp.le.s32.totalorder 2, %s13
      // Predicated region
      $region33: #{tpu_custom_call.1} parent=5 // pred_check
        %p289 = pneg %p288
      $region34: #{tpu_custom_call.1} parent=5 // pred_check_branch
        %291 = sbr.rel (%p289) target = $region36
      $region35: #{tpu_custom_call.1} parent=5 // pred_region
        %s292 = ssub.s32 %s13, 2
        // Predicated region
        $region37: #{tpu_custom_call.1} parent=35 // pred_check
          %p293 = pneg %p84
        $region38: #{tpu_custom_call.1} parent=35 // pred_check_branch
          %295 = sbr.rel (%p293) target = $region40
        $region39: #{tpu_custom_call.1} parent=35 // pred_region
          %s296 = sand.u32 %s69, 1
          %s297 = scalar_lea.sflag [#allocation4], %s296
          %s298 = sand.u32 %s69, 1
          %s299 = smul.addr %s298, 24
          %s300 = scalar_lea.vmem [#allocation5], %s299
          %301 = dma.done %s297, 384
        $region40: #{tpu_custom_call.1} parent=35 // pred_fallthru
          _
      $region36: #{tpu_custom_call.1} parent=5 // pred_fallthru
        _
    $region6: #{tpu_custom_call.1} parent=1 // loop_footer
      %s17 = sadd.s32 1, %s13
    $region7: #{tpu_custom_call.1} parent=1 // loop_footer_branch
      %12 = sbr.rel target = $region3
    $region8: #{tpu_custom_call.1} parent=1 // loop_exit
      _
    %302 = vsyncpa [#allocation3], 1
    %s303 = scalar_lea.sflag [#allocation3], 1
    %304 = vsyncpa %s303, 1
    %305 = vsyncpa [#allocation4], 1
    %s306 = scalar_lea.sflag [#allocation4], 1
    %307 = vsyncpa %s306, 1

</llo_original>
